<compile_context>
chip_gen: v7x
topology: tpu7x:2x2x1
jax: 0.10.0
libtpu: 0.0.40
codegen_flags: <defaults>
</compile_context>

<pallas_src>
import functools
from typing import NamedTuple

import jax
import jax.numpy as jnp
from jax.experimental import pallas as pl
from jax.experimental.pallas import tpu as pltpu

LANE = 128
SUBLANE = 8
_BN_EPS = 1e-5


class LFDNNConfig(NamedTuple):
    text_in: int
    audio_in: int
    video_in: int
    text_h: int
    audio_h: int
    video_h: int
    post_dim: int


def _round_up(x, m):
    return ((x + m - 1) // m) * m


def _cdiv(a, b):
    return -(-a // b)


# -----------------------------------------------------------------------------
# Fused kernel: 3 subnets (BN folded, block-diag) -> in-VMEM fusion -> post MLP
# Single output slab: lanes [0, h_total) hold the fused feature, lane h_total
# holds the scalar prediction M, remaining lanes are zero.
# -----------------------------------------------------------------------------
def _lf_dnn_fused_kernel(a_ref, v_ref, t_ref,
                         w1a_ref, w1v_ref, w1t_ref, b1_ref,
                         w2_ref, b2_ref, w3_ref, b3_ref,
                         pw1_ref, pb1_ref, pw2_ref, pb2_ref, pw3_ref, pb3_ref,
                         out_ref):
    bf16 = jnp.bfloat16
    f32 = jnp.float32

    # Layer 1 of all three subnets fused: the concat [audio|video|text] is
    # expressed as a sum of three narrow-K bf16 MXU dots (BatchNorm is already
    # folded into w1*/b1), so no concatenated input slab ever exists in HBM.
    h = (jnp.dot(a_ref[...].astype(bf16), w1a_ref[...], preferred_element_type=f32)
         + jnp.dot(v_ref[...].astype(bf16), w1v_ref[...], preferred_element_type=f32)
         + jnp.dot(t_ref[...].astype(bf16), w1t_ref[...], preferred_element_type=f32)
         + b1_ref[...])
    h = jnp.maximum(h, 0.0)

    # Subnet layers 2 and 3 as block-diagonal dots (one MXU dot per layer for
    # all modalities).  Layer 3 already writes the feat_pad-wide slab; padded
    # lanes (>= h_total) are zero since weights/biases there are zero.
    h = jnp.maximum(
        jnp.dot(h.astype(bf16), w2_ref[...], preferred_element_type=f32)
        + b2_ref[...], 0.0)
    h = jnp.maximum(
        jnp.dot(h.astype(bf16), w3_ref[...], preferred_element_type=f32)
        + b3_ref[...], 0.0)

    # Post-fusion MLP (Dropout is identity in eval mode).
    y = jnp.maximum(
        jnp.dot(h.astype(bf16), pw1_ref[...], preferred_element_type=f32)
        + pb1_ref[...], 0.0)
    y = jnp.maximum(
        jnp.dot(y.astype(bf16), pw2_ref[...], preferred_element_type=f32)
        + pb2_ref[...], 0.0)

    # Scalar head lands in lane h_total of the same slab (pw3/pb3 are zero
    # everywhere else and h is zero there), so features + M share one store.
    out_ref[...] = (h
                    + jnp.dot(y.astype(bf16), pw3_ref[...],
                              preferred_element_type=f32)
                    + pb3_ref[...])


# -----------------------------------------------------------------------------
# Parameter construction (deterministic, PyTorch-like uniform init)
# -----------------------------------------------------------------------------
def _linear_params(key, in_dim, out_dim):
    kw, kb = jax.random.split(key)
    bound = 1.0 / jnp.sqrt(jnp.float32(in_dim))
    # Stored already transposed: (in, out); bias as (1, out) row.
    w = jax.random.uniform(kw, (in_dim, out_dim), jnp.float32, -bound, bound)
    b = jax.random.uniform(kb, (1, out_dim), jnp.float32, -bound, bound)
    return w, b


def _bn_params(key, in_dim):
    # Non-trivial running stats / affine so the BN fold is actually exercised.
    k1, k2, k3, k4 = jax.random.split(key, 4)
    return dict(
        mean=0.1 * jax.random.normal(k1, (1, in_dim), jnp.float32),
        var=jax.random.uniform(k2, (1, in_dim), jnp.float32, 0.5, 1.5),
        gamma=jax.random.uniform(k3, (1, in_dim), jnp.float32, 0.5, 1.5),
        beta=0.1 * jax.random.normal(k4, (1, in_dim), jnp.float32),
    )


def init_lf_dnn_params(key, cfg: LFDNNConfig):
    keys = jax.random.split(key, 15)
    params = {}
    for idx, (name, in_d, h_d) in enumerate(
            (("audio", cfg.audio_in, cfg.audio_h),
             ("video", cfg.video_in, cfg.video_h),
             ("text", cfg.text_in, cfg.text_h))):
        k0 = 4 * idx
        w1, b1 = _linear_params(keys[k0 + 0], in_d, h_d)
        w2, b2 = _linear_params(keys[k0 + 1], h_d, h_d)
        w3, b3 = _linear_params(keys[k0 + 2], h_d, h_d)
        params[name] = dict(bn=_bn_params(keys[k0 + 3], in_d),
                            w1=w1, b1=b1, w2=w2, b2=b2, w3=w3, b3=b3)
    fusion_in = cfg.text_h + cfg.audio_h + cfg.video_h
    pw1, pb1 = _linear_params(keys[12], fusion_in, cfg.post_dim)
    pw2, pb2 = _linear_params(keys[13], cfg.post_dim, cfg.post_dim)
    pw3, pb3 = _linear_params(keys[14], cfg.post_dim, 1)
    params["post"] = dict(w1=pw1, b1=pb1, w2=pw2, b2=pb2, w3=pw3, b3=pb3)
    return params


def pack_lf_dnn_params(params, cfg: LFDNNConfig):
    """Fold eval-BN into layer 1, build lane-padded bf16 kernel weights.

    Weights are stored bf16 (MXU-native); biases stay f32 and are added after
    the f32 accumulation.  The scalar head (pw3/pb3) is packed so its single
    output column sits at lane `h_total` of the shared output slab.
    """
    h_total = cfg.audio_h + cfg.video_h + cfg.text_h
    h_pad = _round_up(h_total, LANE)
    feat_pad = _round_up(h_total + 1, LANE)   # room for M in lane h_total
    p_pad = _round_up(cfg.post_dim, LANE)

    b1 = jnp.zeros((1, h_pad), jnp.float32)
    w2 = jnp.zeros((h_pad, h_pad), jnp.float32)
    b2 = jnp.zeros((1, h_pad), jnp.float32)
    w3 = jnp.zeros((h_pad, feat_pad), jnp.float32)
    b3 = jnp.zeros((1, feat_pad), jnp.float32)
    w1_blocks = {}

    h_off = 0
    for name, in_d, h_d in (("audio", cfg.audio_in, cfg.audio_h),
                            ("video", cfg.video_in, cfg.video_h),
                            ("text", cfg.text_in, cfg.text_h)):
        p = params[name]
        bn = p["bn"]
        s = bn["gamma"] * jax.lax.rsqrt(bn["var"] + _BN_EPS)      # (1, in_d)
        t = bn["beta"] - bn["mean"] * s                           # (1, in_d)
        w1_f = s.reshape(-1, 1) * p["w1"]                         # diag(s) @ W1
        b1_f = t @ p["w1"] + p["b1"]
        w1_m = jnp.zeros((in_d, h_pad), jnp.float32)
        w1_m = w1_m.at[:, h_off:h_off + h_d].set(w1_f)
        w1_blocks[name] = w1_m.astype(jnp.bfloat16)
        b1 = b1.at[:, h_off:h_off + h_d].set(b1_f)
        w2 = w2.at[h_off:h_off + h_d, h_off:h_off + h_d].set(p["w2"])
        b2 = b2.at[:, h_off:h_off + h_d].set(p["b2"])
        w3 = w3.at[h_off:h_off + h_d, h_off:h_off + h_d].set(p["w3"])
        b3 = b3.at[:, h_off:h_off + h_d].set(p["b3"])
        h_off += h_d

    pp = params["post"]
    pw1 = jnp.zeros((feat_pad, p_pad), jnp.float32).at[:h_total, :cfg.post_dim].set(pp["w1"])
    pb1 = jnp.zeros((1, p_pad), jnp.float32).at[:, :cfg.post_dim].set(pp["b1"])
    pw2 = jnp.zeros((p_pad, p_pad), jnp.float32).at[:cfg.post_dim, :cfg.post_dim].set(pp["w2"])
    pb2 = jnp.zeros((1, p_pad), jnp.float32).at[:, :cfg.post_dim].set(pp["b2"])
    # M written into lane h_total of the shared output slab.
    pw3 = jnp.zeros((p_pad, feat_pad), jnp.float32).at[:cfg.post_dim, h_total:h_total + 1].set(pp["w3"])
    pb3 = jnp.zeros((1, feat_pad), jnp.float32).at[:, h_total:h_total + 1].set(pp["b3"])

    return dict(
        w1a=w1_blocks["audio"], w1v=w1_blocks["video"], w1t=w1_blocks["text"],
        b1=b1,
        w2=w2.astype(jnp.bfloat16), b2=b2,
        w3=w3.astype(jnp.bfloat16), b3=b3,
        pw1=pw1.astype(jnp.bfloat16), pb1=pb1,
        pw2=pw2.astype(jnp.bfloat16), pb2=pb2,
        pw3=pw3.astype(jnp.bfloat16), pb3=pb3,
    )


# -----------------------------------------------------------------------------
# AMIO forward ('lf_dnn' branch) — one fused pallas_call
# -----------------------------------------------------------------------------
@functools.partial(jax.jit, static_argnums=(0,))
def amio_forward(cfg: LFDNNConfig, packed, text_cutx, audio_cutx, video_cutx):
    # Inputs are (B, 1, dim) as in LF_DNN; squeeze(1) glue in plain JAX.
    text_x = jnp.squeeze(text_cutx, axis=1).astype(jnp.float32)
    audio_x = jnp.squeeze(audio_cutx, axis=1).astype(jnp.float32)
    video_x = jnp.squeeze(video_cutx, axis=1).astype(jnp.float32)

    batch = text_x.shape[0]
    h_total = cfg.audio_h + cfg.video_h + cfg.text_h
    h_pad = _round_up(h_total, LANE)
    feat_pad = _round_up(h_total + 1, LANE)
    p_pad = _round_up(cfg.post_dim, LANE)
    in_total = cfg.audio_in + cfg.video_in + cfg.text_in

    # Batch tiling: target ~512 rows per grid step (multiple of 8), block
    # sized to the batch so padding waste is <= 8 rows per block, and >= 2
    # grid steps once there is enough work so v7x's two TensorCores both get
    # a share of the "parallel" batch axis.  VMEM stays far below limits.
    padded_rows = _round_up(max(batch, 1), SUBLANE)
    target_rows = 512
    min_blocks = 2 if padded_rows >= 256 else 1
    num_blocks = max(_cdiv(padded_rows, target_rows), min_blocks)
    block_rows = _round_up(_cdiv(padded_rows, num_blocks), SUBLANE)
    padded_batch = block_rows * num_blocks
    pad_rows = padded_batch - batch

    # Only a small batch-row pad per modality; no concatenated slab in HBM.
    audio_p = jnp.pad(audio_x, ((0, pad_rows), (0, 0)))
    video_p = jnp.pad(video_x, ((0, pad_rows), (0, 0)))
    text_p = jnp.pad(text_x, ((0, pad_rows), (0, 0)))

    grid = (num_blocks,)

    def row_spec(width):
        return pl.BlockSpec((block_rows, width), lambda i: (i, 0))

    def w_spec(shape):
        # Weights/biases stay resident across grid steps.
        return pl.BlockSpec(shape, lambda i: (0, 0))

    flops = 2 * padded_batch * (in_total * h_pad
                                + h_pad * h_pad + h_pad * feat_pad
                                + feat_pad * p_pad + p_pad * p_pad
                                + p_pad * feat_pad)
    weight_elems = (in_total * h_pad + h_pad * h_pad + h_pad * feat_pad
                    + feat_pad * p_pad + p_pad * p_pad + p_pad * feat_pad)
    bias_elems = 2 * h_pad + 2 * feat_pad + 2 * p_pad
    bytes_accessed = (4 * padded_batch * (in_total + feat_pad)
                      + 2 * weight_elems + 4 * bias_elems)

    out = pl.pallas_call(
        _lf_dnn_fused_kernel,
        out_shape=jax.ShapeDtypeStruct((padded_batch, feat_pad), jnp.float32),
        grid=grid,
        in_specs=[
            row_spec(cfg.audio_in), row_spec(cfg.video_in), row_spec(cfg.text_in),
            w_spec((cfg.audio_in, h_pad)), w_spec((cfg.video_in, h_pad)),
            w_spec((cfg.text_in, h_pad)), w_spec((1, h_pad)),
            w_spec((h_pad, h_pad)), w_spec((1, h_pad)),
            w_spec((h_pad, feat_pad)), w_spec((1, feat_pad)),
            w_spec((feat_pad, p_pad)), w_spec((1, p_pad)),
            w_spec((p_pad, p_pad)), w_spec((1, p_pad)),
            w_spec((p_pad, feat_pad)), w_spec((1, feat_pad)),
        ],
        out_specs=row_spec(feat_pad),
        compiler_params=pltpu.CompilerParams(
            dimension_semantics=("parallel",)),
        cost_estimate=pl.CostEstimate(flops=flops, transcendentals=0,
                                      bytes_accessed=bytes_accessed),
    )(audio_p, video_p, text_p,
      packed["w1a"], packed["w1v"], packed["w1t"], packed["b1"],
      packed["w2"], packed["b2"], packed["w3"], packed["b3"],
      packed["pw1"], packed["pb1"], packed["pw2"], packed["pb2"],
      packed["pw3"], packed["pb3"])

    a_h, v_h = cfg.audio_h, cfg.video_h
    feat = out[:batch, :h_total]
    return {
        "Feature_t": feat[:, a_h + v_h:],
        "Feature_a": feat[:, :a_h],
        "Feature_v": feat[:, a_h:a_h + v_h],
        "Feature_f": feat,
        "M": out[:batch, h_total:h_total + 1],
    }


# -----------------------------------------------------------------------------
# Pure-JAX f32 reference (unpacked params) for a sanity check
# -----------------------------------------------------------------------------
def _ref_forward(params, text_cutx, audio_cutx, video_cutx):
    def subnet(p, x):
        bn = p["bn"]
        n = (x - bn["mean"]) / jnp.sqrt(bn["var"] + _BN_EPS) * bn["gamma"] + bn["beta"]
        y = jnp.maximum(n @ p["w1"] + p["b1"], 0.0)
        y = jnp.maximum(y @ p["w2"] + p["b2"], 0.0)
        return jnp.maximum(y @ p["w3"] + p["b3"], 0.0)

    a = subnet(params["audio"], jnp.squeeze(audio_cutx, 1))
    v = subnet(params["video"], jnp.squeeze(video_cutx, 1))
    t = subnet(params["text"], jnp.squeeze(text_cutx, 1))
    f = jnp.concatenate([a, v, t], axis=-1)
    pp = params["post"]
    y = jnp.maximum(f @ pp["w1"] + pp["b1"], 0.0)
    y = jnp.maximum(y @ pp["w2"] + pp["b2"], 0.0)
    m = y @ pp["w3"] + pp["b3"]
    return dict(Feature_t=t, Feature_a=a, Feature_v=v, Feature_f=f, M=m)


if __name__ == "__main__":
    # args for the 'lf_dnn' branch of AMIO (small synthetic config).
    # TODO(synk): only the 'lf_dnn' branch of AMIO's MODEL_MAP is implemented
    #             ('tfn'/'lmf' dispatch targets are out of scope here).
    cfg = LFDNNConfig(text_in=32, audio_in=16, video_in=24,
                      text_h=32, audio_h=16, video_h=16, post_dim=32)
    batch = 2

    key = jax.random.PRNGKey(0)
    k_params, k_t, k_a, k_v = jax.random.split(key, 4)
    params = init_lf_dnn_params(k_params, cfg)
    packed = pack_lf_dnn_params(params, cfg)

    text_cutx = jax.random.normal(k_t, (batch, 1, cfg.text_in), jnp.float32)
    audio_cutx = jax.random.normal(k_a, (batch, 1, cfg.audio_in), jnp.float32)
    video_cutx = jax.random.normal(k_v, (batch, 1, cfg.video_in), jnp.float32)

    out = amio_forward(cfg, packed, text_cutx, audio_cutx, video_cutx)
    jax.block_until_ready(out)

    ref = _ref_forward(params, text_cutx, audio_cutx, video_cutx)
    assert out["M"].shape == (batch, 1)
    assert out["Feature_f"].shape == (batch, cfg.audio_h + cfg.video_h + cfg.text_h)
    # bf16 MXU path vs f32 reference: tolerance relaxed accordingly.
    for name in ("Feature_a", "Feature_v", "Feature_t", "Feature_f", "M"):
        assert jnp.allclose(out[name], ref[name], atol=5e-2, rtol=5e-2), name

    print("KERNEL_OK")
</pallas_src>

<mosaic_0001>
module attributes {stable_mosaic.version = 11 : i64} {
  func.func @_lf_dnn_fused_kernel(%arg0: i32, %arg1: memref<8x16xf32, #tpu.memory_space<vmem>>, %arg2: memref<8x24xf32, #tpu.memory_space<vmem>>, %arg3: memref<8x32xf32, #tpu.memory_space<vmem>>, %arg4: memref<16x128xbf16, #tpu.memory_space<vmem>>, %arg5: memref<24x128xbf16, #tpu.memory_space<vmem>>, %arg6: memref<32x128xbf16, #tpu.memory_space<vmem>>, %arg7: memref<1x128xf32, #tpu.memory_space<vmem>>, %arg8: memref<128x128xbf16, #tpu.memory_space<vmem>>, %arg9: memref<1x128xf32, #tpu.memory_space<vmem>>, %arg10: memref<128x128xbf16, #tpu.memory_space<vmem>>, %arg11: memref<1x128xf32, #tpu.memory_space<vmem>>, %arg12: memref<128x128xbf16, #tpu.memory_space<vmem>>, %arg13: memref<1x128xf32, #tpu.memory_space<vmem>>, %arg14: memref<128x128xbf16, #tpu.memory_space<vmem>>, %arg15: memref<1x128xf32, #tpu.memory_space<vmem>>, %arg16: memref<128x128xbf16, #tpu.memory_space<vmem>>, %arg17: memref<1x128xf32, #tpu.memory_space<vmem>>, %arg18: memref<8x128xf32, #tpu.memory_space<vmem>>) attributes {dimension_semantics = [#tpu.dimension_semantics<parallel>], iteration_bounds = array<i64: 1>, scalar_prefetch = 0 : i64, scratch_operands = 0 : i64, tpu.core_type = #tpu.core_type<tc>, window_params = [{transform_indices = @transform_0, window_bounds = array<i64: 8, 16>}, {transform_indices = @transform_1, window_bounds = array<i64: 8, 24>}, {transform_indices = @transform_2, window_bounds = array<i64: 8, 32>}, {pipeline_mode = #tpu.pipeline_mode<synchronous>, transform_indices = @transform_3, window_bounds = array<i64: 16, 128>}, {pipeline_mode = #tpu.pipeline_mode<synchronous>, transform_indices = @transform_4, window_bounds = array<i64: 24, 128>}, {pipeline_mode = #tpu.pipeline_mode<synchronous>, transform_indices = @transform_5, window_bounds = array<i64: 32, 128>}, {pipeline_mode = #tpu.pipeline_mode<synchronous>, transform_indices = @transform_6, window_bounds = array<i64: 1, 128>}, {pipeline_mode = #tpu.pipeline_mode<synchronous>, transform_indices = @transform_7, window_bounds = array<i64: 128, 128>}, {pipeline_mode = #tpu.pipeline_mode<synchronous>, transform_indices = @transform_8, window_bounds = array<i64: 1, 128>}, {pipeline_mode = #tpu.pipeline_mode<synchronous>, transform_indices = @transform_9, window_bounds = array<i64: 128, 128>}, {pipeline_mode = #tpu.pipeline_mode<synchronous>, transform_indices = @transform_10, window_bounds = array<i64: 1, 128>}, {pipeline_mode = #tpu.pipeline_mode<synchronous>, transform_indices = @transform_11, window_bounds = array<i64: 128, 128>}, {pipeline_mode = #tpu.pipeline_mode<synchronous>, transform_indices = @transform_12, window_bounds = array<i64: 1, 128>}, {pipeline_mode = #tpu.pipeline_mode<synchronous>, transform_indices = @transform_13, window_bounds = array<i64: 128, 128>}, {pipeline_mode = #tpu.pipeline_mode<synchronous>, transform_indices = @transform_14, window_bounds = array<i64: 1, 128>}, {pipeline_mode = #tpu.pipeline_mode<synchronous>, transform_indices = @transform_15, window_bounds = array<i64: 128, 128>}, {pipeline_mode = #tpu.pipeline_mode<synchronous>, transform_indices = @transform_16, window_bounds = array<i64: 1, 128>}, {transform_indices = @transform_17, window_bounds = array<i64: 8, 128>}]} {
    %c0 = arith.constant 0 : index
    %c0_0 = arith.constant 0 : index
    %0 = vector.load %arg1[%c0, %c0_0] : memref<8x16xf32, #tpu.memory_space<vmem>>, vector<8x16xf32>
    %1 = arith.truncf %0 : vector<8x16xf32> to vector<8x16xbf16>
    %c0_1 = arith.constant 0 : index
    %c0_2 = arith.constant 0 : index
    %2 = vector.load %arg4[%c0_1, %c0_2] : memref<16x128xbf16, #tpu.memory_space<vmem>>, vector<16x128xbf16>
    %cst = arith.constant dense<0.000000e+00> : vector<8x128xf32>
    %3 = tpu.matmul %1, %2, %cst {dimension_numbers = #tpu.dot_dimension_numbers<[1], [0], [0], [1], [0, 0, 1, 1], [], []>} : vector<8x16xbf16>, vector<16x128xbf16>, vector<8x128xf32> -> vector<8x128xf32>
    %c0_3 = arith.constant 0 : index
    %c0_4 = arith.constant 0 : index
    %4 = vector.load %arg2[%c0_3, %c0_4] : memref<8x24xf32, #tpu.memory_space<vmem>>, vector<8x24xf32>
    %5 = arith.truncf %4 : vector<8x24xf32> to vector<8x24xbf16>
    %c0_5 = arith.constant 0 : index
    %c0_6 = arith.constant 0 : index
    %6 = vector.load %arg5[%c0_5, %c0_6] : memref<24x128xbf16, #tpu.memory_space<vmem>>, vector<24x128xbf16>
    %cst_7 = arith.constant dense<0.000000e+00> : vector<8x128xf32>
    %7 = tpu.matmul %5, %6, %cst_7 {dimension_numbers = #tpu.dot_dimension_numbers<[1], [0], [0], [1], [0, 0, 1, 1], [], []>} : vector<8x24xbf16>, vector<24x128xbf16>, vector<8x128xf32> -> vector<8x128xf32>
    %8 = arith.addf %3, %7 : vector<8x128xf32>
    %c0_8 = arith.constant 0 : index
    %c0_9 = arith.constant 0 : index
    %9 = vector.load %arg3[%c0_8, %c0_9] : memref<8x32xf32, #tpu.memory_space<vmem>>, vector<8x32xf32>
    %10 = arith.truncf %9 : vector<8x32xf32> to vector<8x32xbf16>
    %c0_10 = arith.constant 0 : index
    %c0_11 = arith.constant 0 : index
    %11 = vector.load %arg6[%c0_10, %c0_11] : memref<32x128xbf16, #tpu.memory_space<vmem>>, vector<32x128xbf16>
    %cst_12 = arith.constant dense<0.000000e+00> : vector<8x128xf32>
    %12 = tpu.matmul %10, %11, %cst_12 {dimension_numbers = #tpu.dot_dimension_numbers<[1], [0], [0], [1], [0, 0, 1, 1], [], []>} : vector<8x32xbf16>, vector<32x128xbf16>, vector<8x128xf32> -> vector<8x128xf32>
    %13 = arith.addf %8, %12 : vector<8x128xf32>
    %c0_13 = arith.constant 0 : index
    %c0_14 = arith.constant 0 : index
    %14 = vector.load %arg7[%c0_13, %c0_14] : memref<1x128xf32, #tpu.memory_space<vmem>>, vector<1x128xf32>
    %15 = vector.broadcast %14 : vector<1x128xf32> to vector<8x128xf32>
    %16 = arith.addf %13, %15 : vector<8x128xf32>
    %cst_15 = arith.constant 0.000000e+00 : f32
    %17 = vector.broadcast %cst_15 : f32 to vector<8x128xf32>
    %18 = arith.maximumf %16, %17 : vector<8x128xf32>
    %19 = arith.truncf %18 : vector<8x128xf32> to vector<8x128xbf16>
    %c0_16 = arith.constant 0 : index
    %c0_17 = arith.constant 0 : index
    %20 = vector.load %arg8[%c0_16, %c0_17] : memref<128x128xbf16, #tpu.memory_space<vmem>>, vector<128x128xbf16>
    %cst_18 = arith.constant dense<0.000000e+00> : vector<8x128xf32>
    %21 = tpu.matmul %19, %20, %cst_18 {dimension_numbers = #tpu.dot_dimension_numbers<[1], [0], [0], [1], [0, 0, 1, 1], [], []>} : vector<8x128xbf16>, vector<128x128xbf16>, vector<8x128xf32> -> vector<8x128xf32>
    %c0_19 = arith.constant 0 : index
    %c0_20 = arith.constant 0 : index
    %22 = vector.load %arg9[%c0_19, %c0_20] : memref<1x128xf32, #tpu.memory_space<vmem>>, vector<1x128xf32>
    %23 = vector.broadcast %22 : vector<1x128xf32> to vector<8x128xf32>
    %24 = arith.addf %21, %23 : vector<8x128xf32>
    %cst_21 = arith.constant 0.000000e+00 : f32
    %25 = vector.broadcast %cst_21 : f32 to vector<8x128xf32>
    %26 = arith.maximumf %24, %25 : vector<8x128xf32>
    %27 = arith.truncf %26 : vector<8x128xf32> to vector<8x128xbf16>
    %c0_22 = arith.constant 0 : index
    %c0_23 = arith.constant 0 : index
    %28 = vector.load %arg10[%c0_22, %c0_23] : memref<128x128xbf16, #tpu.memory_space<vmem>>, vector<128x128xbf16>
    %cst_24 = arith.constant dense<0.000000e+00> : vector<8x128xf32>
    %29 = tpu.matmul %27, %28, %cst_24 {dimension_numbers = #tpu.dot_dimension_numbers<[1], [0], [0], [1], [0, 0, 1, 1], [], []>} : vector<8x128xbf16>, vector<128x128xbf16>, vector<8x128xf32> -> vector<8x128xf32>
    %c0_25 = arith.constant 0 : index
    %c0_26 = arith.constant 0 : index
    %30 = vector.load %arg11[%c0_25, %c0_26] : memref<1x128xf32, #tpu.memory_space<vmem>>, vector<1x128xf32>
    %31 = vector.broadcast %30 : vector<1x128xf32> to vector<8x128xf32>
    %32 = arith.addf %29, %31 : vector<8x128xf32>
    %cst_27 = arith.constant 0.000000e+00 : f32
    %33 = vector.broadcast %cst_27 : f32 to vector<8x128xf32>
    %34 = arith.maximumf %32, %33 : vector<8x128xf32>
    %35 = arith.truncf %34 : vector<8x128xf32> to vector<8x128xbf16>
    %c0_28 = arith.constant 0 : index
    %c0_29 = arith.constant 0 : index
    %36 = vector.load %arg12[%c0_28, %c0_29] : memref<128x128xbf16, #tpu.memory_space<vmem>>, vector<128x128xbf16>
    %cst_30 = arith.constant dense<0.000000e+00> : vector<8x128xf32>
    %37 = tpu.matmul %35, %36, %cst_30 {dimension_numbers = #tpu.dot_dimension_numbers<[1], [0], [0], [1], [0, 0, 1, 1], [], []>} : vector<8x128xbf16>, vector<128x128xbf16>, vector<8x128xf32> -> vector<8x128xf32>
    %c0_31 = arith.constant 0 : index
    %c0_32 = arith.constant 0 : index
    %38 = vector.load %arg13[%c0_31, %c0_32] : memref<1x128xf32, #tpu.memory_space<vmem>>, vector<1x128xf32>
    %39 = vector.broadcast %38 : vector<1x128xf32> to vector<8x128xf32>
    %40 = arith.addf %37, %39 : vector<8x128xf32>
    %cst_33 = arith.constant 0.000000e+00 : f32
    %41 = vector.broadcast %cst_33 : f32 to vector<8x128xf32>
    %42 = arith.maximumf %40, %41 : vector<8x128xf32>
    %43 = arith.truncf %42 : vector<8x128xf32> to vector<8x128xbf16>
    %c0_34 = arith.constant 0 : index
    %c0_35 = arith.constant 0 : index
    %44 = vector.load %arg14[%c0_34, %c0_35] : memref<128x128xbf16, #tpu.memory_space<vmem>>, vector<128x128xbf16>
    %cst_36 = arith.constant dense<0.000000e+00> : vector<8x128xf32>
    %45 = tpu.matmul %43, %44, %cst_36 {dimension_numbers = #tpu.dot_dimension_numbers<[1], [0], [0], [1], [0, 0, 1, 1], [], []>} : vector<8x128xbf16>, vector<128x128xbf16>, vector<8x128xf32> -> vector<8x128xf32>
    %c0_37 = arith.constant 0 : index
    %c0_38 = arith.constant 0 : index
    %46 = vector.load %arg15[%c0_37, %c0_38] : memref<1x128xf32, #tpu.memory_space<vmem>>, vector<1x128xf32>
    %47 = vector.broadcast %46 : vector<1x128xf32> to vector<8x128xf32>
    %48 = arith.addf %45, %47 : vector<8x128xf32>
    %cst_39 = arith.constant 0.000000e+00 : f32
    %49 = vector.broadcast %cst_39 : f32 to vector<8x128xf32>
    %50 = arith.maximumf %48, %49 : vector<8x128xf32>
    %51 = arith.truncf %50 : vector<8x128xf32> to vector<8x128xbf16>
    %c0_40 = arith.constant 0 : index
    %c0_41 = arith.constant 0 : index
    %52 = vector.load %arg16[%c0_40, %c0_41] : memref<128x128xbf16, #tpu.memory_space<vmem>>, vector<128x128xbf16>
    %cst_42 = arith.constant dense<0.000000e+00> : vector<8x128xf32>
    %53 = tpu.matmul %51, %52, %cst_42 {dimension_numbers = #tpu.dot_dimension_numbers<[1], [0], [0], [1], [0, 0, 1, 1], [], []>} : vector<8x128xbf16>, vector<128x128xbf16>, vector<8x128xf32> -> vector<8x128xf32>
    %54 = arith.addf %34, %53 : vector<8x128xf32>
    %c0_43 = arith.constant 0 : index
    %c0_44 = arith.constant 0 : index
    %55 = vector.load %arg17[%c0_43, %c0_44] : memref<1x128xf32, #tpu.memory_space<vmem>>, vector<1x128xf32>
    %56 = vector.broadcast %55 : vector<1x128xf32> to vector<8x128xf32>
    %57 = arith.addf %54, %56 : vector<8x128xf32>
    %c0_45 = arith.constant 0 : index
    %c0_46 = arith.constant 0 : index
    %58 = vector.load %arg18[%c0_45, %c0_46] : memref<8x128xf32, #tpu.memory_space<vmem>>, vector<8x128xf32>
    tpu.vector_store %arg18[%c0_45, %c0_46], %57 {strides = array<i32>} : memref<8x128xf32, #tpu.memory_space<vmem>>, vector<8x128xf32>,
    return
  }
  func.func @transform_0(%arg0: i32) -> (i32, i32) {
    %c0_i32 = arith.constant 0 : i32
    %c0_i32_0 = arith.constant 0 : i32
    return %arg0, %c0_i32 : i32, i32
  }
  func.func @transform_1(%arg0: i32) -> (i32, i32) {
    %c0_i32 = arith.constant 0 : i32
    %c0_i32_0 = arith.constant 0 : i32
    return %arg0, %c0_i32 : i32, i32
  }
  func.func @transform_2(%arg0: i32) -> (i32, i32) {
    %c0_i32 = arith.constant 0 : i32
    %c0_i32_0 = arith.constant 0 : i32
    return %arg0, %c0_i32 : i32, i32
  }
  func.func @transform_3(%arg0: i32) -> (i32, i32) {
    %c0_i32 = arith.constant 0 : i32
    %c0_i32_0 = arith.constant 0 : i32
    %c0_i32_1 = arith.constant 0 : i32
    return %c0_i32, %c0_i32_0 : i32, i32
  }
  func.func @transform_4(%arg0: i32) -> (i32, i32) {
    %c0_i32 = arith.constant 0 : i32
    %c0_i32_0 = arith.constant 0 : i32
    %c0_i32_1 = arith.constant 0 : i32
    return %c0_i32, %c0_i32_0 : i32, i32
  }
  func.func @transform_5(%arg0: i32) -> (i32, i32) {
    %c0_i32 = arith.constant 0 : i32
    %c0_i32_0 = arith.constant 0 : i32
    %c0_i32_1 = arith.constant 0 : i32
    return %c0_i32, %c0_i32_0 : i32, i32
  }
  func.func @transform_6(%arg0: i32) -> (i32, i32) {
    %c0_i32 = arith.constant 0 : i32
    %c0_i32_0 = arith.constant 0 : i32
    %c0_i32_1 = arith.constant 0 : i32
    return %c0_i32, %c0_i32_0 : i32, i32
  }
  func.func @transform_7(%arg0: i32) -> (i32, i32) {
    %c0_i32 = arith.constant 0 : i32
    %c0_i32_0 = arith.constant 0 : i32
    %c0_i32_1 = arith.constant 0 : i32
    return %c0_i32, %c0_i32_0 : i32, i32
  }
  func.func @transform_8(%arg0: i32) -> (i32, i32) {
    %c0_i32 = arith.constant 0 : i32
    %c0_i32_0 = arith.constant 0 : i32
    %c0_i32_1 = arith.constant 0 : i32
    return %c0_i32, %c0_i32_0 : i32, i32
  }
  func.func @transform_9(%arg0: i32) -> (i32, i32) {
    %c0_i32 = arith.constant 0 : i32
    %c0_i32_0 = arith.constant 0 : i32
    %c0_i32_1 = arith.constant 0 : i32
    return %c0_i32, %c0_i32_0 : i32, i32
  }
  func.func @transform_10(%arg0: i32) -> (i32, i32) {
    %c0_i32 = arith.constant 0 : i32
    %c0_i32_0 = arith.constant 0 : i32
    %c0_i32_1 = arith.constant 0 : i32
    return %c0_i32, %c0_i32_0 : i32, i32
  }
  func.func @transform_11(%arg0: i32) -> (i32, i32) {
    %c0_i32 = arith.constant 0 : i32
    %c0_i32_0 = arith.constant 0 : i32
    %c0_i32_1 = arith.constant 0 : i32
    return %c0_i32, %c0_i32_0 : i32, i32
  }
  func.func @transform_12(%arg0: i32) -> (i32, i32) {
    %c0_i32 = arith.constant 0 : i32
    %c0_i32_0 = arith.constant 0 : i32
    %c0_i32_1 = arith.constant 0 : i32
    return %c0_i32, %c0_i32_0 : i32, i32
  }
  func.func @transform_13(%arg0: i32) -> (i32, i32) {
    %c0_i32 = arith.constant 0 : i32
    %c0_i32_0 = arith.constant 0 : i32
    %c0_i32_1 = arith.constant 0 : i32
    return %c0_i32, %c0_i32_0 : i32, i32
  }
  func.func @transform_14(%arg0: i32) -> (i32, i32) {
    %c0_i32 = arith.constant 0 : i32
    %c0_i32_0 = arith.constant 0 : i32
    %c0_i32_1 = arith.constant 0 : i32
    return %c0_i32, %c0_i32_0 : i32, i32
  }
  func.func @transform_15(%arg0: i32) -> (i32, i32) {
    %c0_i32 = arith.constant 0 : i32
    %c0_i32_0 = arith.constant 0 : i32
    %c0_i32_1 = arith.constant 0 : i32
    return %c0_i32, %c0_i32_0 : i32, i32
  }
  func.func @transform_16(%arg0: i32) -> (i32, i32) {
    %c0_i32 = arith.constant 0 : i32
    %c0_i32_0 = arith.constant 0 : i32
    %c0_i32_1 = arith.constant 0 : i32
    return %c0_i32, %c0_i32_0 : i32, i32
  }
  func.func @transform_17(%arg0: i32) -> (i32, i32) {
    %c0_i32 = arith.constant 0 : i32
    %c0_i32_0 = arith.constant 0 : i32
    return %arg0, %c0_i32 : i32, i32
  }
}

</mosaic_0001>

<llo_original>
// kernel: amio_forward.1
$region0: #{amio_forward.1}
  #allocation0 [shape = 'u32[]', space=smem, size = 0x4, offset = 0x4, fixed_abs, tag = 'smem constant byte address 0x4 - core index']
  #allocation1 [shape = 'u32[144,128]{1,0:T(1,128)}', space=vmem, size = 0x12000, scoped, tag = 'internal scratch']
  %s0 = inlined_call_operand.vmem [shape: f32[8,16], index: 0, kind: input, shape index: {}]
  %s1 = inlined_call_operand.vmem [shape: f32[8,24], index: 1, kind: input, shape index: {}]
  %s2 = inlined_call_operand.vmem [shape: f32[8,32], index: 2, kind: input, shape index: {}]
  %s3 = inlined_call_operand.vmem [shape: bf16[16,128], index: 3, kind: input, shape index: {}]
  %s4 = inlined_call_operand.hbm [shape: bf16[24,128], index: 4, kind: input, shape index: {}]
  %s5 = inlined_call_operand.vmem [shape: bf16[32,128], index: 5, kind: input, shape index: {}]
  %s6 = inlined_call_operand.vmem [shape: f32[1,128], index: 6, kind: input, shape index: {}]
  %s7 = inlined_call_operand.vmem [shape: bf16[128,128], index: 7, kind: input, shape index: {}]
  %s8 = inlined_call_operand.hbm [shape: f32[1,128], index: 8, kind: input, shape index: {}]
  %s9 = inlined_call_operand.hbm [shape: bf16[128,128], index: 9, kind: input, shape index: {}]
  %s10 = inlined_call_operand.hbm [shape: f32[1,128], index: 10, kind: input, shape index: {}]
  %s11 = inlined_call_operand.hbm [shape: bf16[128,128], index: 11, kind: input, shape index: {}]
  %s12 = inlined_call_operand.hbm [shape: f32[1,128], index: 12, kind: input, shape index: {}]
  %s13 = inlined_call_operand.hbm [shape: bf16[128,128], index: 13, kind: input, shape index: {}]
  %s14 = inlined_call_operand.hbm [shape: f32[1,128], index: 14, kind: input, shape index: {}]
  %s15 = inlined_call_operand.hbm [shape: bf16[128,128], index: 15, kind: input, shape index: {}]
  %s16 = inlined_call_operand.hbm [shape: f32[1,128], index: 16, kind: input, shape index: {}]
  %s17 = inlined_call_operand.vmem [shape: f32[8,128], index: 17, kind: output, shape index: {}]
  %s18 = sld [smem:[#allocation0]]
  $region118: #{amio_forward.1} parent=0
    _
  %s20 = ssub.s32 1, %s18
  %s21 = scalar_select 0, %s20, %s18
  $region1: #{amio_forward.1} parent=0
    #allocation2 [shape = 'u8[6144]{0}', space=vmem, size = 0x1800, scoped, tag = 'input window, operand 4, single buffered']
    #allocation3 [shape = 's32[1]{0}', space=sflag, size = 0x4, scoped, tag = 'scoped memory for amio_forward.1']
    #allocation4 [shape = 'u8[512]{0}', space=vmem, size = 0x400, scoped, tag = 'input window, operand 8, single buffered']
    #allocation5 [shape = 's32[1]{0}', space=sflag, size = 0x4, scoped, tag = 'scoped memory for amio_forward.1']
    #allocation6 [shape = 'u8[32768]{0}', space=vmem, size = 0x8000, scoped, tag = 'input window, operand 9, single buffered']
    #allocation7 [shape = 'u8[512]{0}', space=vmem, size = 0x400, scoped, tag = 'input window, operand 10, single buffered']
    #allocation8 [shape = 's32[1]{0}', space=sflag, size = 0x4, scoped, tag = 'scoped memory for amio_forward.1']
    #allocation9 [shape = 'u8[32768]{0}', space=vmem, size = 0x8000, scoped, tag = 'input window, operand 11, single buffered']
    #allocation10 [shape = 'u8[512]{0}', space=vmem, size = 0x400, scoped, tag = 'input window, operand 12, single buffered']
    #allocation11 [shape = 's32[1]{0}', space=sflag, size = 0x4, scoped, tag = 'scoped memory for amio_forward.1']
    #allocation12 [shape = 'u8[32768]{0}', space=vmem, size = 0x8000, scoped, tag = 'input window, operand 13, single buffered']
    #allocation13 [shape = 'u8[512]{0}', space=vmem, size = 0x400, scoped, tag = 'input window, operand 14, single buffered']
    #allocation14 [shape = 's32[1]{0}', space=sflag, size = 0x4, scoped, tag = 'scoped memory for amio_forward.1']
    #allocation15 [shape = 'u8[32768]{0}', space=vmem, size = 0x8000, scoped, tag = 'input window, operand 15, single buffered']
    #allocation16 [shape = 'u8[512]{0}', space=vmem, size = 0x400, scoped, tag = 'input window, operand 16, single buffered']
    #allocation17 [shape = 's32[1]{0}', space=sflag, size = 0x4, scoped, tag = 'scoped memory for amio_forward.1']
    %22 = vsyncpa [#allocation3], 0
    %23 = vsyncpa [#allocation5], 0
    %24 = vsyncpa [#allocation8], 0
    %25 = vsyncpa [#allocation11], 0
    %26 = vsyncpa [#allocation14], 0
    %27 = vsyncpa [#allocation17], 0
    // Predicated region
    $region2: #{amio_forward.1} parent=1 // pred_check
      _
    $region3: #{amio_forward.1} parent=1 // pred_check_branch
      %29 = sbr.rel (0) target = $region5
    $region4: #{amio_forward.1} parent=1 // pred_region
      _
    $region5: #{amio_forward.1} parent=1 // pred_fallthru
      _
    // Predicated region
    $region6: #{amio_forward.1} parent=1 // pred_check
      _
    $region7: #{amio_forward.1} parent=1 // pred_check_branch
      %31 = sbr.rel (0) target = $region9
    $region8: #{amio_forward.1} parent=1 // pred_region
      _
    $region9: #{amio_forward.1} parent=1 // pred_fallthru
      _
    // Predicated region
    $region10: #{amio_forward.1} parent=1 // pred_check
      _
    $region11: #{amio_forward.1} parent=1 // pred_check_branch
      %33 = sbr.rel (0) target = $region13
    $region12: #{amio_forward.1} parent=1 // pred_region
      _
    $region13: #{amio_forward.1} parent=1 // pred_fallthru
      _
    // Predicated region
    $region14: #{amio_forward.1} parent=1 // pred_check
      _
    $region15: #{amio_forward.1} parent=1 // pred_check_branch
      %35 = sbr.rel (0) target = $region17
    $region16: #{amio_forward.1} parent=1 // pred_region
      _
    $region17: #{amio_forward.1} parent=1 // pred_fallthru
      _
    // Predicated region
    $region18: #{amio_forward.1} parent=1 // pred_check
      _
    $region19: #{amio_forward.1} parent=1 // pred_check_branch
      %37 = sbr.rel (0) target = $region21
    $region20: #{amio_forward.1} parent=1 // pred_region
      %s39 = ssub.s32 192, 192
      %40 = vsyncadd [#allocation3], %s39
      %s41 = sshll.u32 [#allocation2], 4
      %s42 = int_to_ptr.vmem [resolvable:$true] %s41
      %47 = dma.hbm_to_vmem [thread:$0]  %s4, 192, %s42, [#allocation3], 64, 64, 4
    $region21: #{amio_forward.1} parent=1 // pred_fallthru
      _
    // Predicated region
    $region22: #{amio_forward.1} parent=1 // pred_check
      _
    $region23: #{amio_forward.1} parent=1 // pred_check_branch
      %49 = sbr.rel (0) target = $region25
    $region24: #{amio_forward.1} parent=1 // pred_region
      _
    $region25: #{amio_forward.1} parent=1 // pred_fallthru
      _
    // Predicated region
    $region26: #{amio_forward.1} parent=1 // pred_check
      _
    $region27: #{amio_forward.1} parent=1 // pred_check_branch
      %51 = sbr.rel (0) target = $region29
    $region28: #{amio_forward.1} parent=1 // pred_region
      _
    $region29: #{amio_forward.1} parent=1 // pred_fallthru
      _
    // Predicated region
    $region30: #{amio_forward.1} parent=1 // pred_check
      _
    $region31: #{amio_forward.1} parent=1 // pred_check_branch
      %53 = sbr.rel (0) target = $region33
    $region32: #{amio_forward.1} parent=1 // pred_region
      _
    $region33: #{amio_forward.1} parent=1 // pred_fallthru
      _
    // Predicated region
    $region34: #{amio_forward.1} parent=1 // pred_check
      _
    $region35: #{amio_forward.1} parent=1 // pred_check_branch
      %55 = sbr.rel (0) target = $region37
    $region36: #{amio_forward.1} parent=1 // pred_region
      %s57 = ssub.s32 16, 16
      %58 = vsyncadd [#allocation5], %s57
      %s60 = sshll.u32 [#allocation4], 4
      %s61 = int_to_ptr.vmem [resolvable:$true] %s60
      %63 = dma.hbm_to_vmem [thread:$0]  %s8, 16, %s61, [#allocation5]
    $region37: #{amio_forward.1} parent=1 // pred_fallthru
      _
    // Predicated region
    $region38: #{amio_forward.1} parent=1 // pred_check
      _
    $region39: #{amio_forward.1} parent=1 // pred_check_branch
      %65 = sbr.rel (0) target = $region41
    $region40: #{amio_forward.1} parent=1 // pred_region
      %s67 = ssub.s32 1024, 1024
      %68 = vsyncadd [#allocation5], %s67
      %s69 = sshll.u32 [#allocation6], 4
      %s70 = int_to_ptr.vmem [resolvable:$true] %s69
      %75 = dma.hbm_to_vmem [thread:$0]  %s9, 1024, %s70, [#allocation5], 64, 64, 4
    $region41: #{amio_forward.1} parent=1 // pred_fallthru
      _
    // Predicated region
    $region42: #{amio_forward.1} parent=1 // pred_check
      _
    $region43: #{amio_forward.1} parent=1 // pred_check_branch
      %77 = sbr.rel (0) target = $region45
    $region44: #{amio_forward.1} parent=1 // pred_region
      %s79 = ssub.s32 16, 16
      %80 = vsyncadd [#allocation8], %s79
      %s82 = sshll.u32 [#allocation7], 4
      %s83 = int_to_ptr.vmem [resolvable:$true] %s82
      %85 = dma.hbm_to_vmem [thread:$0]  %s10, 16, %s83, [#allocation8]
    $region45: #{amio_forward.1} parent=1 // pred_fallthru
      _
    // Predicated region
    $region46: #{amio_forward.1} parent=1 // pred_check
      _
    $region47: #{amio_forward.1} parent=1 // pred_check_branch
      %87 = sbr.rel (0) target = $region49
    $region48: #{amio_forward.1} parent=1 // pred_region
      %s89 = ssub.s32 1024, 1024
      %90 = vsyncadd [#allocation8], %s89
      %s91 = sshll.u32 [#allocation9], 4
      %s92 = int_to_ptr.vmem [resolvable:$true] %s91
      %97 = dma.hbm_to_vmem [thread:$0]  %s11, 1024, %s92, [#allocation8], 64, 64, 4
    $region49: #{amio_forward.1} parent=1 // pred_fallthru
      _
    // Predicated region
    $region50: #{amio_forward.1} parent=1 // pred_check
      _
    $region51: #{amio_forward.1} parent=1 // pred_check_branch
      %99 = sbr.rel (0) target = $region53
    $region52: #{amio_forward.1} parent=1 // pred_region
      %s101 = ssub.s32 16, 16
      %102 = vsyncadd [#allocation11], %s101
      %s104 = sshll.u32 [#allocation10], 4
      %s105 = int_to_ptr.vmem [resolvable:$true] %s104
      %107 = dma.hbm_to_vmem [thread:$0]  %s12, 16, %s105, [#allocation11]
    $region53: #{amio_forward.1} parent=1 // pred_fallthru
      _
    // Predicated region
    $region54: #{amio_forward.1} parent=1 // pred_check
      _
    $region55: #{amio_forward.1} parent=1 // pred_check_branch
      %109 = sbr.rel (0) target = $region57
    $region56: #{amio_forward.1} parent=1 // pred_region
      %s111 = ssub.s32 1024, 1024
      %112 = vsyncadd [#allocation11], %s111
      %s113 = sshll.u32 [#allocation12], 4
      %s114 = int_to_ptr.vmem [resolvable:$true] %s113
      %119 = dma.hbm_to_vmem [thread:$0]  %s13, 1024, %s114, [#allocation11], 64, 64, 4
    $region57: #{amio_forward.1} parent=1 // pred_fallthru
      _
    // Predicated region
    $region58: #{amio_forward.1} parent=1 // pred_check
      _
    $region59: #{amio_forward.1} parent=1 // pred_check_branch
      %121 = sbr.rel (0) target = $region61
    $region60: #{amio_forward.1} parent=1 // pred_region
      %s123 = ssub.s32 16, 16
      %124 = vsyncadd [#allocation14], %s123
      %s126 = sshll.u32 [#allocation13], 4
      %s127 = int_to_ptr.vmem [resolvable:$true] %s126
      %129 = dma.hbm_to_vmem [thread:$0]  %s14, 16, %s127, [#allocation14]
    $region61: #{amio_forward.1} parent=1 // pred_fallthru
      _
    // Predicated region
    $region62: #{amio_forward.1} parent=1 // pred_check
      _
    $region63: #{amio_forward.1} parent=1 // pred_check_branch
      %131 = sbr.rel (0) target = $region65
    $region64: #{amio_forward.1} parent=1 // pred_region
      %s133 = ssub.s32 1024, 1024
      %134 = vsyncadd [#allocation14], %s133
      %s135 = sshll.u32 [#allocation15], 4
      %s136 = int_to_ptr.vmem [resolvable:$true] %s135
      %141 = dma.hbm_to_vmem [thread:$0]  %s15, 1024, %s136, [#allocation14], 64, 64, 4
    $region65: #{amio_forward.1} parent=1 // pred_fallthru
      _
    // Predicated region
    $region66: #{amio_forward.1} parent=1 // pred_check
      _
    $region67: #{amio_forward.1} parent=1 // pred_check_branch
      %143 = sbr.rel (0) target = $region69
    $region68: #{amio_forward.1} parent=1 // pred_region
      %s145 = ssub.s32 16, 16
      %146 = vsyncadd [#allocation17], %s145
      %s148 = sshll.u32 [#allocation16], 4
      %s149 = int_to_ptr.vmem [resolvable:$true] %s148
      %151 = dma.hbm_to_vmem [thread:$0]  %s16, 16, %s149, [#allocation17]
    $region69: #{amio_forward.1} parent=1 // pred_fallthru
      _
    // Predicated region
    $region70: #{amio_forward.1} parent=1 // pred_check
      _
    $region71: #{amio_forward.1} parent=1 // pred_check_branch
      %153 = sbr.rel (0) target = $region73
    $region72: #{amio_forward.1} parent=1 // pred_region
      %154 = dma.done [#allocation3], 192
    $region73: #{amio_forward.1} parent=1 // pred_fallthru
      _
    // Predicated region
    $region74: #{amio_forward.1} parent=1 // pred_check
      _
    $region75: #{amio_forward.1} parent=1 // pred_check_branch
      %156 = sbr.rel (0) target = $region77
    $region76: #{amio_forward.1} parent=1 // pred_region
      %157 = dma.done [#allocation5], 16
    $region77: #{amio_forward.1} parent=1 // pred_fallthru
      _
    // Predicated region
    $region78: #{amio_forward.1} parent=1 // pred_check
      _
    $region79: #{amio_forward.1} parent=1 // pred_check_branch
      %159 = sbr.rel (0) target = $region81
    $region80: #{amio_forward.1} parent=1 // pred_region
      %160 = dma.done [#allocation5], 1024
    $region81: #{amio_forward.1} parent=1 // pred_fallthru
      _
    // Predicated region
    $region82: #{amio_forward.1} parent=1 // pred_check
      _
    $region83: #{amio_forward.1} parent=1 // pred_check_branch
      %162 = sbr.rel (0) target = $region85
    $region84: #{amio_forward.1} parent=1 // pred_region
      %163 = dma.done [#allocation8], 16
    $region85: #{amio_forward.1} parent=1 // pred_fallthru
      _
    // Predicated region
    $region86: #{amio_forward.1} parent=1 // pred_check
      _
    $region87: #{amio_forward.1} parent=1 // pred_check_branch
      %165 = sbr.rel (0) target = $region89
    $region88: #{amio_forward.1} parent=1 // pred_region
      %166 = dma.done [#allocation8], 1024
    $region89: #{amio_forward.1} parent=1 // pred_fallthru
      _
    // Predicated region
    $region90: #{amio_forward.1} parent=1 // pred_check
      _
    $region91: #{amio_forward.1} parent=1 // pred_check_branch
      %168 = sbr.rel (0) target = $region93
    $region92: #{amio_forward.1} parent=1 // pred_region
      %169 = dma.done [#allocation11], 16
    $region93: #{amio_forward.1} parent=1 // pred_fallthru
      _
    // Predicated region
    $region94: #{amio_forward.1} parent=1 // pred_check
      _
    $region95: #{amio_forward.1} parent=1 // pred_check_branch
      %171 = sbr.rel (0) target = $region97
    $region96: #{amio_forward.1} parent=1 // pred_region
      %172 = dma.done [#allocation11], 1024
    $region97: #{amio_forward.1} parent=1 // pred_fallthru
      _
    // Predicated region
    $region98: #{amio_forward.1} parent=1 // pred_check
      _
    $region99: #{amio_forward.1} parent=1 // pred_check_branch
      %174 = sbr.rel (0) target = $region101
    $region100: #{amio_forward.1} parent=1 // pred_region
      %175 = dma.done [#allocation14], 16
    $region101: #{amio_forward.1} parent=1 // pred_fallthru
      _
    // Predicated region
    $region102: #{amio_forward.1} parent=1 // pred_check
      _
    $region103: #{amio_forward.1} parent=1 // pred_check_branch
      %177 = sbr.rel (0) target = $region105
    $region104: #{amio_forward.1} parent=1 // pred_region
      %178 = dma.done [#allocation14], 1024
    $region105: #{amio_forward.1} parent=1 // pred_fallthru
      _
    // Predicated region
    $region106: #{amio_forward.1} parent=1 // pred_check
      _
    $region107: #{amio_forward.1} parent=1 // pred_check_branch
      %180 = sbr.rel (0) target = $region109
    $region108: #{amio_forward.1} parent=1 // pred_region
      %181 = dma.done [#allocation17], 16
    $region109: #{amio_forward.1} parent=1 // pred_fallthru
      _
    %v183 = vld [vmem:[%s0] sm:$0xff]
    %v184 = vpack.c.bf16 %v183, %v183
    %v185 = vld [vmem:[%s3] sm:$0xf]
    %v186 = vld [vmem:[%s3 + $0x4] sm:$0xf]
    %v187 = vld [vmem:[%s1] sm:$0xff]
    %v188 = vpack.c.bf16 %v187, %v187
    %v189 = vld [vmem:[#allocation2] sm:$0xf]
    %v190 = vld [vmem:[#allocation2 + $0x4] sm:$0xf]
    %v191 = vld [vmem:[#allocation2 + $0x8] sm:$0xf]
    %v195 = vunpack.c.l.b16 %v189
    %v196 = vunpack.c.l.b16 %v190
    %v197 = vunpack.c.l.b16 %v191
    %v198 = vpack.c.b16 %v196, %v195
    %v199 = vpack.c.b16 %v197, %v197
    %vm201 = vcmask 195584
    %v203 = vsel %vm201, %v188, 0
    %vm205 = vcmask 1043456
    %v207 = vsel %vm205, %v199, 0
    %209 = vmatprep.subr.bf16.mxu0 0
    %210 = vmatpush1.bf16.msra.mxu0 %v198
    %211 = vmatprep.subr.bf16.mxu0 0
    %212 = vmatpush1.bf16.msra.mxu0 %v207
    %213 = vmatprep.subr.bf16.mxu0 0
    %214 = vmatpush1.bf16.msra.mxu0 0
    %215 = vmatprep.subr.bf16.mxu0 0
    %216 = vmatpush1.bf16.msra.mxu0 0
    %217 = vmatprep.subr.bf16.mxu0 0
    %218 = vmatpush1.bf16.msra.mxu0 0
    %219 = vmatprep.subr.bf16.mxu0 0
    %220 = vmatpush1.bf16.msra.mxu0 0
    %221 = vmatprep.subr.bf16.mxu0 0
    %222 = vmatpush1.bf16.msra.mxu0 0
    %223 = vmatprep.subr.bf16.mxu0 0
    %224 = vmatpush1.bf16.msra.mxu0 0
    %225 = vmatprep.subr.bf16.mxu0 0
    %226 = vmatpush1.bf16.msra.mxu0 0
    %227 = vmatprep.subr.bf16.mxu0 0
    %228 = vmatpush1.bf16.msra.mxu0 0
    %229 = vmatprep.subr.bf16.mxu0 0
    %230 = vmatpush1.bf16.msra.mxu0 0
    %231 = vmatprep.subr.bf16.mxu0 0
    %232 = vmatpush1.bf16.msra.mxu0 0
    %233 = vmatprep.subr.bf16.mxu0 0
    %234 = vmatpush1.bf16.msra.mxu0 0
    %235 = vmatprep.subr.bf16.mxu0 0
    %236 = vmatpush1.bf16.msra.mxu0 0
    %237 = vmatprep.subr.bf16.mxu0 0
    %238 = vmatpush1.bf16.msra.mxu0 0
    %239 = vmatprep.subr.bf16.mxu0 0
    %240 = vmatpush1.bf16.msra.mxu0 0
    %241 = vmatprep.mubr.bf16.mxu0 0
    %242 = vmatmul.mubr.bf16.gmra.mrb[0].mxu0 %v203
    %v243 = vpop.f32.mrb[0].mxu0
    %v244 = vadd.f32 0.0, %v243
    %v245 = vpop.f32.mrb[0].mxu0
    %v246 = vpop.f32.mrb[0].mxu0
    %v247 = vpop.f32.mrb[0].mxu0
    %248 = vdwg.mxu0
    %v251 = vunpack.c.l.b16 %v185
    %v252 = vunpack.c.l.b16 %v186
    %v253 = vpack.c.b16 %v252, %v251
    %vm255 = vcmask 130048
    %v257 = vsel %vm255, %v184, 0
    %259 = vmatprep.subr.bf16.mxu0 0
    %260 = vmatpush1.bf16.msra.mxu0 %v253
    %261 = vmatprep.subr.bf16.mxu0 0
    %262 = vmatpush1.bf16.msra.mxu0 0
    %263 = vmatprep.subr.bf16.mxu0 0
    %264 = vmatpush1.bf16.msra.mxu0 0
    %265 = vmatprep.subr.bf16.mxu0 0
    %266 = vmatpush1.bf16.msra.mxu0 0
    %267 = vmatprep.subr.bf16.mxu0 0
    %268 = vmatpush1.bf16.msra.mxu0 0
    %269 = vmatprep.subr.bf16.mxu0 0
    %270 = vmatpush1.bf16.msra.mxu0 0
    %271 = vmatprep.subr.bf16.mxu0 0
    %272 = vmatpush1.bf16.msra.mxu0 0
    %273 = vmatprep.subr.bf16.mxu0 0
    %274 = vmatpush1.bf16.msra.mxu0 0
    %275 = vmatprep.subr.bf16.mxu0 0
    %276 = vmatpush1.bf16.msra.mxu0 0
    %277 = vmatprep.subr.bf16.mxu0 0
    %278 = vmatpush1.bf16.msra.mxu0 0
    %279 = vmatprep.subr.bf16.mxu0 0
    %280 = vmatpush1.bf16.msra.mxu0 0
    %281 = vmatprep.subr.bf16.mxu0 0
    %282 = vmatpush1.bf16.msra.mxu0 0
    %283 = vmatprep.subr.bf16.mxu0 0
    %284 = vmatpush1.bf16.msra.mxu0 0
    %285 = vmatprep.subr.bf16.mxu0 0
    %286 = vmatpush1.bf16.msra.mxu0 0
    %287 = vmatprep.subr.bf16.mxu0 0
    %288 = vmatpush1.bf16.msra.mxu0 0
    %289 = vmatprep.subr.bf16.mxu0 0
    %290 = vmatpush1.bf16.msra.mxu0 0
    %291 = vmatprep.mubr.bf16.mxu0 0
    %292 = vmatmul.mubr.bf16.gmra.mrb[0].mxu0 %v257
    %v293 = vpop.f32.mrb[0].mxu0
    %v294 = vadd.f32 %v244, %v293
    %v295 = vpop.f32.mrb[0].mxu0
    %v296 = vpop.f32.mrb[0].mxu0
    %v297 = vpop.f32.mrb[0].mxu0
    %298 = vdwg.mxu0
    %v299 = vld [vmem:[%s2] sm:$0xff]
    %v300 = vpack.c.bf16 %v299, %v299
    %v301 = vld [vmem:[%s5] sm:$0xf]
    %v302 = vld [vmem:[%s5 + $0x4] sm:$0xf]
    %v303 = vld [vmem:[%s5 + $0x8] sm:$0xf]
    %v304 = vld [vmem:[%s5 + $0xc] sm:$0xf]
    %v309 = vunpack.c.l.b16 %v301
    %v310 = vunpack.c.l.b16 %v302
    %v311 = vunpack.c.l.b16 %v303
    %v312 = vunpack.c.l.b16 %v304
    %v313 = vpack.c.b16 %v310, %v309
    %v314 = vpack.c.b16 %v312, %v311
    %vm317 = vcmask 261120
    %v319 = vsel %vm317, %v300, 0
    %321 = vmatprep.subr.bf16.mxu0 0
    %322 = vmatpush1.bf16.msra.mxu0 %v313
    %323 = vmatprep.subr.bf16.mxu0 0
    %324 = vmatpush1.bf16.msra.mxu0 %v314
    %325 = vmatprep.subr.bf16.mxu0 0
    %326 = vmatpush1.bf16.msra.mxu0 0
    %327 = vmatprep.subr.bf16.mxu0 0
    %328 = vmatpush1.bf16.msra.mxu0 0
    %329 = vmatprep.subr.bf16.mxu0 0
    %330 = vmatpush1.bf16.msra.mxu0 0
    %331 = vmatprep.subr.bf16.mxu0 0
    %332 = vmatpush1.bf16.msra.mxu0 0
    %333 = vmatprep.subr.bf16.mxu0 0
    %334 = vmatpush1.bf16.msra.mxu0 0
    %335 = vmatprep.subr.bf16.mxu0 0
    %336 = vmatpush1.bf16.msra.mxu0 0
    %337 = vmatprep.subr.bf16.mxu0 0
    %338 = vmatpush1.bf16.msra.mxu0 0
    %339 = vmatprep.subr.bf16.mxu0 0
    %340 = vmatpush1.bf16.msra.mxu0 0
    %341 = vmatprep.subr.bf16.mxu0 0
    %342 = vmatpush1.bf16.msra.mxu0 0
    %343 = vmatprep.subr.bf16.mxu0 0
    %344 = vmatpush1.bf16.msra.mxu0 0
    %345 = vmatprep.subr.bf16.mxu0 0
    %346 = vmatpush1.bf16.msra.mxu0 0
    %347 = vmatprep.subr.bf16.mxu0 0
    %348 = vmatpush1.bf16.msra.mxu0 0
    %349 = vmatprep.subr.bf16.mxu0 0
    %350 = vmatpush1.bf16.msra.mxu0 0
    %351 = vmatprep.subr.bf16.mxu0 0
    %352 = vmatpush1.bf16.msra.mxu0 0
    %353 = vmatprep.mubr.bf16.mxu0 0
    %354 = vmatmul.mubr.bf16.gmra.mrb[0].mxu0 %v319
    %v355 = vpop.f32.mrb[0].mxu0
    %v356 = vadd.f32 0.0, %v355
    %v357 = vpop.f32.mrb[0].mxu0
    %v358 = vpop.f32.mrb[0].mxu0
    %v359 = vpop.f32.mrb[0].mxu0
    %360 = vdwg.mxu0
    %v361 = vadd.f32 %v294, %v356
    %v362 = vld [vmem:[%s6] sm:$0x1]
    %v364 = vlaneseq
    %v365 = vshrl.u32 %v364, 7
    %v366 = vsub.s32 0, %v365
    %v367 = vrot.slane %v362, %v366
    %v369 = vadd.f32 %v361, %v367
    %v370 = vmax.f32 %v369, 0.0
    %v371 = vpack.c.bf16 %v370, %v370
    %v372 = vld [vmem:[%s7] sm:$0xf]
    %v373 = vld [vmem:[%s7 + $0x4] sm:$0xf]
    %v374 = vld [vmem:[%s7 + $0x8] sm:$0xf]
    %v375 = vld [vmem:[%s7 + $0xc] sm:$0xf]
    %v376 = vld [vmem:[%s7 + $0x10] sm:$0xf]
    %v377 = vld [vmem:[%s7 + $0x14] sm:$0xf]
    %v378 = vld [vmem:[%s7 + $0x18] sm:$0xf]
    %v379 = vld [vmem:[%s7 + $0x1c] sm:$0xf]
    %v380 = vld [vmem:[%s7 + $0x20] sm:$0xf]
    %v381 = vld [vmem:[%s7 + $0x24] sm:$0xf]
    %v382 = vld [vmem:[%s7 + $0x28] sm:$0xf]
    %v383 = vld [vmem:[%s7 + $0x2c] sm:$0xf]
    %v384 = vld [vmem:[%s7 + $0x30] sm:$0xf]
    %v385 = vld [vmem:[%s7 + $0x34] sm:$0xf]
    %v386 = vld [vmem:[%s7 + $0x38] sm:$0xf]
    %v387 = vld [vmem:[%s7 + $0x3c] sm:$0xf]
    %v388 = vld [vmem:[#allocation4] sm:$0x1]
    %v390 = vlaneseq
    %v391 = vshrl.u32 %v390, 7
    %v392 = vsub.s32 0, %v391
    %v393 = vrot.slane %v388, %v392
    %v411 = vunpack.c.l.b16 %v372
    %v412 = vunpack.c.l.b16 %v373
    %v413 = vunpack.c.l.b16 %v374
    %v414 = vunpack.c.l.b16 %v375
    %v415 = vunpack.c.l.b16 %v376
    %v416 = vunpack.c.l.b16 %v377
    %v417 = vunpack.c.l.b16 %v378
    %v418 = vunpack.c.l.b16 %v379
    %v419 = vunpack.c.l.b16 %v380
    %v420 = vunpack.c.l.b16 %v381
    %v421 = vunpack.c.l.b16 %v382
    %v422 = vunpack.c.l.b16 %v383
    %v423 = vunpack.c.l.b16 %v384
    %v424 = vunpack.c.l.b16 %v385
    %v425 = vunpack.c.l.b16 %v386
    %v426 = vunpack.c.l.b16 %v387
    %v427 = vpack.c.b16 %v412, %v411
    %v428 = vpack.c.b16 %v414, %v413
    %v429 = vpack.c.b16 %v416, %v415
    %v430 = vpack.c.b16 %v418, %v417
    %v431 = vpack.c.b16 %v420, %v419
    %v432 = vpack.c.b16 %v422, %v421
    %v433 = vpack.c.b16 %v424, %v423
    %v434 = vpack.c.b16 %v426, %v425
    %443 = vmatprep.subr.bf16.mxu0 0
    %444 = vmatpush1.bf16.msra.mxu0 %v427
    %445 = vmatprep.subr.bf16.mxu0 0
    %446 = vmatpush1.bf16.msra.mxu0 %v428
    %447 = vmatprep.subr.bf16.mxu0 0
    %448 = vmatpush1.bf16.msra.mxu0 %v429
    %449 = vmatprep.subr.bf16.mxu0 0
    %450 = vmatpush1.bf16.msra.mxu0 %v430
    %451 = vmatprep.subr.bf16.mxu0 0
    %452 = vmatpush1.bf16.msra.mxu0 %v431
    %453 = vmatprep.subr.bf16.mxu0 0
    %454 = vmatpush1.bf16.msra.mxu0 %v432
    %455 = vmatprep.subr.bf16.mxu0 0
    %456 = vmatpush1.bf16.msra.mxu0 %v433
    %457 = vmatprep.subr.bf16.mxu0 0
    %458 = vmatpush1.bf16.msra.mxu0 %v434
    %459 = vmatprep.subr.bf16.mxu0 0
    %460 = vmatpush1.bf16.msra.mxu0 0
    %461 = vmatprep.subr.bf16.mxu0 0
    %462 = vmatpush1.bf16.msra.mxu0 0
    %463 = vmatprep.subr.bf16.mxu0 0
    %464 = vmatpush1.bf16.msra.mxu0 0
    %465 = vmatprep.subr.bf16.mxu0 0
    %466 = vmatpush1.bf16.msra.mxu0 0
    %467 = vmatprep.subr.bf16.mxu0 0
    %468 = vmatpush1.bf16.msra.mxu0 0
    %469 = vmatprep.subr.bf16.mxu0 0
    %470 = vmatpush1.bf16.msra.mxu0 0
    %471 = vmatprep.subr.bf16.mxu0 0
    %472 = vmatpush1.bf16.msra.mxu0 0
    %473 = vmatprep.subr.bf16.mxu0 0
    %474 = vmatpush1.bf16.msra.mxu0 0
    %475 = vmatprep.mubr.bf16.mxu0 0
    %476 = vmatmul.mubr.bf16.gmra.mrb[0].mxu0 %v371
    %v477 = vpop.f32.mrb[0].mxu0
    %v478 = vadd.f32 %v393, %v477
    %v479 = vpop.f32.mrb[0].mxu0
    %v480 = vpop.f32.mrb[0].mxu0
    %v481 = vpop.f32.mrb[0].mxu0
    %482 = vdwg.mxu0
    %v483 = vmax.f32 %v478, 0.0
    %v484 = vpack.c.bf16 %v483, %v483
    %v485 = vld [vmem:[#allocation6] sm:$0xf]
    %v486 = vld [vmem:[#allocation6 + $0x4] sm:$0xf]
    %v487 = vld [vmem:[#allocation6 + $0x8] sm:$0xf]
    %v488 = vld [vmem:[#allocation6 + $0xc] sm:$0xf]
    %v489 = vld [vmem:[#allocation6 + $0x10] sm:$0xf]
    %v490 = vld [vmem:[#allocation6 + $0x14] sm:$0xf]
    %v491 = vld [vmem:[#allocation6 + $0x18] sm:$0xf]
    %v492 = vld [vmem:[#allocation6 + $0x1c] sm:$0xf]
    %v493 = vld [vmem:[#allocation6 + $0x20] sm:$0xf]
    %v494 = vld [vmem:[#allocation6 + $0x24] sm:$0xf]
    %v495 = vld [vmem:[#allocation6 + $0x28] sm:$0xf]
    %v496 = vld [vmem:[#allocation6 + $0x2c] sm:$0xf]
    %v497 = vld [vmem:[#allocation6 + $0x30] sm:$0xf]
    %v498 = vld [vmem:[#allocation6 + $0x34] sm:$0xf]
    %v499 = vld [vmem:[#allocation6 + $0x38] sm:$0xf]
    %v500 = vld [vmem:[#allocation6 + $0x3c] sm:$0xf]
    %v501 = vld [vmem:[#allocation7] sm:$0x1]
    %v503 = vlaneseq
    %v504 = vshrl.u32 %v503, 7
    %v505 = vsub.s32 0, %v504
    %v506 = vrot.slane %v501, %v505
    %v524 = vunpack.c.l.b16 %v485
    %v525 = vunpack.c.l.b16 %v486
    %v526 = vunpack.c.l.b16 %v487
    %v527 = vunpack.c.l.b16 %v488
    %v528 = vunpack.c.l.b16 %v489
    %v529 = vunpack.c.l.b16 %v490
    %v530 = vunpack.c.l.b16 %v491
    %v531 = vunpack.c.l.b16 %v492
    %v532 = vunpack.c.l.b16 %v493
    %v533 = vunpack.c.l.b16 %v494
    %v534 = vunpack.c.l.b16 %v495
    %v535 = vunpack.c.l.b16 %v496
    %v536 = vunpack.c.l.b16 %v497
    %v537 = vunpack.c.l.b16 %v498
    %v538 = vunpack.c.l.b16 %v499
    %v539 = vunpack.c.l.b16 %v500
    %v540 = vpack.c.b16 %v525, %v524
    %v541 = vpack.c.b16 %v527, %v526
    %v542 = vpack.c.b16 %v529, %v528
    %v543 = vpack.c.b16 %v531, %v530
    %v544 = vpack.c.b16 %v533, %v532
    %v545 = vpack.c.b16 %v535, %v534
    %v546 = vpack.c.b16 %v537, %v536
    %v547 = vpack.c.b16 %v539, %v538
    %556 = vmatprep.subr.bf16.mxu0 0
    %557 = vmatpush1.bf16.msra.mxu0 %v540
    %558 = vmatprep.subr.bf16.mxu0 0
    %559 = vmatpush1.bf16.msra.mxu0 %v541
    %560 = vmatprep.subr.bf16.mxu0 0
    %561 = vmatpush1.bf16.msra.mxu0 %v542
    %562 = vmatprep.subr.bf16.mxu0 0
    %563 = vmatpush1.bf16.msra.mxu0 %v543
    %564 = vmatprep.subr.bf16.mxu0 0
    %565 = vmatpush1.bf16.msra.mxu0 %v544
    %566 = vmatprep.subr.bf16.mxu0 0
    %567 = vmatpush1.bf16.msra.mxu0 %v545
    %568 = vmatprep.subr.bf16.mxu0 0
    %569 = vmatpush1.bf16.msra.mxu0 %v546
    %570 = vmatprep.subr.bf16.mxu0 0
    %571 = vmatpush1.bf16.msra.mxu0 %v547
    %572 = vmatprep.subr.bf16.mxu0 0
    %573 = vmatpush1.bf16.msra.mxu0 0
    %574 = vmatprep.subr.bf16.mxu0 0
    %575 = vmatpush1.bf16.msra.mxu0 0
    %576 = vmatprep.subr.bf16.mxu0 0
    %577 = vmatpush1.bf16.msra.mxu0 0
    %578 = vmatprep.subr.bf16.mxu0 0
    %579 = vmatpush1.bf16.msra.mxu0 0
    %580 = vmatprep.subr.bf16.mxu0 0
    %581 = vmatpush1.bf16.msra.mxu0 0
    %582 = vmatprep.subr.bf16.mxu0 0
    %583 = vmatpush1.bf16.msra.mxu0 0
    %584 = vmatprep.subr.bf16.mxu0 0
    %585 = vmatpush1.bf16.msra.mxu0 0
    %586 = vmatprep.subr.bf16.mxu0 0
    %587 = vmatpush1.bf16.msra.mxu0 0
    %588 = vmatprep.mubr.bf16.mxu0 0
    %589 = vmatmul.mubr.bf16.gmra.mrb[0].mxu0 %v484
    %v590 = vpop.f32.mrb[0].mxu0
    %v591 = vadd.f32 %v506, %v590
    %v592 = vpop.f32.mrb[0].mxu0
    %v593 = vpop.f32.mrb[0].mxu0
    %v594 = vpop.f32.mrb[0].mxu0
    %595 = vdwg.mxu0
    %v596 = vmax.f32 %v591, 0.0
    %v597 = vpack.c.bf16 %v596, %v596
    %v598 = vld [vmem:[#allocation9] sm:$0xf]
    %v599 = vld [vmem:[#allocation9 + $0x4] sm:$0xf]
    %v600 = vld [vmem:[#allocation9 + $0x8] sm:$0xf]
    %v601 = vld [vmem:[#allocation9 + $0xc] sm:$0xf]
    %v602 = vld [vmem:[#allocation9 + $0x10] sm:$0xf]
    %v603 = vld [vmem:[#allocation9 + $0x14] sm:$0xf]
    %v604 = vld [vmem:[#allocation9 + $0x18] sm:$0xf]
    %v605 = vld [vmem:[#allocation9 + $0x1c] sm:$0xf]
    %v606 = vld [vmem:[#allocation9 + $0x20] sm:$0xf]
    %v607 = vld [vmem:[#allocation9 + $0x24] sm:$0xf]
    %v608 = vld [vmem:[#allocation9 + $0x28] sm:$0xf]
    %v609 = vld [vmem:[#allocation9 + $0x2c] sm:$0xf]
    %v610 = vld [vmem:[#allocation9 + $0x30] sm:$0xf]
    %v611 = vld [vmem:[#allocation9 + $0x34] sm:$0xf]
    %v612 = vld [vmem:[#allocation9 + $0x38] sm:$0xf]
    %v613 = vld [vmem:[#allocation9 + $0x3c] sm:$0xf]
    %v614 = vld [vmem:[#allocation10] sm:$0x1]
    %v616 = vlaneseq
    %v617 = vshrl.u32 %v616, 7
    %v618 = vsub.s32 0, %v617
    %v619 = vrot.slane %v614, %v618
    %v637 = vunpack.c.l.b16 %v598
    %v638 = vunpack.c.l.b16 %v599
    %v639 = vunpack.c.l.b16 %v600
    %v640 = vunpack.c.l.b16 %v601
    %v641 = vunpack.c.l.b16 %v602
    %v642 = vunpack.c.l.b16 %v603
    %v643 = vunpack.c.l.b16 %v604
    %v644 = vunpack.c.l.b16 %v605
    %v645 = vunpack.c.l.b16 %v606
    %v646 = vunpack.c.l.b16 %v607
    %v647 = vunpack.c.l.b16 %v608
    %v648 = vunpack.c.l.b16 %v609
    %v649 = vunpack.c.l.b16 %v610
    %v650 = vunpack.c.l.b16 %v611
    %v651 = vunpack.c.l.b16 %v612
    %v652 = vunpack.c.l.b16 %v613
    %v653 = vpack.c.b16 %v638, %v637
    %v654 = vpack.c.b16 %v640, %v639
    %v655 = vpack.c.b16 %v642, %v641
    %v656 = vpack.c.b16 %v644, %v643
    %v657 = vpack.c.b16 %v646, %v645
    %v658 = vpack.c.b16 %v648, %v647
    %v659 = vpack.c.b16 %v650, %v649
    %v660 = vpack.c.b16 %v652, %v651
    %669 = vmatprep.subr.bf16.mxu0 0
    %670 = vmatpush1.bf16.msra.mxu0 %v653
    %671 = vmatprep.subr.bf16.mxu0 0
    %672 = vmatpush1.bf16.msra.mxu0 %v654
    %673 = vmatprep.subr.bf16.mxu0 0
    %674 = vmatpush1.bf16.msra.mxu0 %v655
    %675 = vmatprep.subr.bf16.mxu0 0
    %676 = vmatpush1.bf16.msra.mxu0 %v656
    %677 = vmatprep.subr.bf16.mxu0 0
    %678 = vmatpush1.bf16.msra.mxu0 %v657
    %679 = vmatprep.subr.bf16.mxu0 0
    %680 = vmatpush1.bf16.msra.mxu0 %v658
    %681 = vmatprep.subr.bf16.mxu0 0
    %682 = vmatpush1.bf16.msra.mxu0 %v659
    %683 = vmatprep.subr.bf16.mxu0 0
    %684 = vmatpush1.bf16.msra.mxu0 %v660
    %685 = vmatprep.subr.bf16.mxu0 0
    %686 = vmatpush1.bf16.msra.mxu0 0
    %687 = vmatprep.subr.bf16.mxu0 0
    %688 = vmatpush1.bf16.msra.mxu0 0
    %689 = vmatprep.subr.bf16.mxu0 0
    %690 = vmatpush1.bf16.msra.mxu0 0
    %691 = vmatprep.subr.bf16.mxu0 0
    %692 = vmatpush1.bf16.msra.mxu0 0
    %693 = vmatprep.subr.bf16.mxu0 0
    %694 = vmatpush1.bf16.msra.mxu0 0
    %695 = vmatprep.subr.bf16.mxu0 0
    %696 = vmatpush1.bf16.msra.mxu0 0
    %697 = vmatprep.subr.bf16.mxu0 0
    %698 = vmatpush1.bf16.msra.mxu0 0
    %699 = vmatprep.subr.bf16.mxu0 0
    %700 = vmatpush1.bf16.msra.mxu0 0
    %701 = vmatprep.mubr.bf16.mxu0 0
    %702 = vmatmul.mubr.bf16.gmra.mrb[0].mxu0 %v597
    %v703 = vpop.f32.mrb[0].mxu0
    %v704 = vadd.f32 %v619, %v703
    %v705 = vpop.f32.mrb[0].mxu0
    %v706 = vpop.f32.mrb[0].mxu0
    %v707 = vpop.f32.mrb[0].mxu0
    %708 = vdwg.mxu0
    %v709 = vmax.f32 %v704, 0.0
    %v710 = vpack.c.bf16 %v709, %v709
    %v711 = vld [vmem:[#allocation12] sm:$0xf]
    %v712 = vld [vmem:[#allocation12 + $0x4] sm:$0xf]
    %v713 = vld [vmem:[#allocation12 + $0x8] sm:$0xf]
    %v714 = vld [vmem:[#allocation12 + $0xc] sm:$0xf]
    %v715 = vld [vmem:[#allocation12 + $0x10] sm:$0xf]
    %v716 = vld [vmem:[#allocation12 + $0x14] sm:$0xf]
    %v717 = vld [vmem:[#allocation12 + $0x18] sm:$0xf]
    %v718 = vld [vmem:[#allocation12 + $0x1c] sm:$0xf]
    %v719 = vld [vmem:[#allocation12 + $0x20] sm:$0xf]
    %v720 = vld [vmem:[#allocation12 + $0x24] sm:$0xf]
    %v721 = vld [vmem:[#allocation12 + $0x28] sm:$0xf]
    %v722 = vld [vmem:[#allocation12 + $0x2c] sm:$0xf]
    %v723 = vld [vmem:[#allocation12 + $0x30] sm:$0xf]
    %v724 = vld [vmem:[#allocation12 + $0x34] sm:$0xf]
    %v725 = vld [vmem:[#allocation12 + $0x38] sm:$0xf]
    %v726 = vld [vmem:[#allocation12 + $0x3c] sm:$0xf]
    %v727 = vld [vmem:[#allocation13] sm:$0x1]
    %v729 = vlaneseq
    %v730 = vshrl.u32 %v729, 7
    %v731 = vsub.s32 0, %v730
    %v732 = vrot.slane %v727, %v731
    %v750 = vunpack.c.l.b16 %v711
    %v751 = vunpack.c.l.b16 %v712
    %v752 = vunpack.c.l.b16 %v713
    %v753 = vunpack.c.l.b16 %v714
    %v754 = vunpack.c.l.b16 %v715
    %v755 = vunpack.c.l.b16 %v716
    %v756 = vunpack.c.l.b16 %v717
    %v757 = vunpack.c.l.b16 %v718
    %v758 = vunpack.c.l.b16 %v719
    %v759 = vunpack.c.l.b16 %v720
    %v760 = vunpack.c.l.b16 %v721
    %v761 = vunpack.c.l.b16 %v722
    %v762 = vunpack.c.l.b16 %v723
    %v763 = vunpack.c.l.b16 %v724
    %v764 = vunpack.c.l.b16 %v725
    %v765 = vunpack.c.l.b16 %v726
    %v766 = vpack.c.b16 %v751, %v750
    %v767 = vpack.c.b16 %v753, %v752
    %v768 = vpack.c.b16 %v755, %v754
    %v769 = vpack.c.b16 %v757, %v756
    %v770 = vpack.c.b16 %v759, %v758
    %v771 = vpack.c.b16 %v761, %v760
    %v772 = vpack.c.b16 %v763, %v762
    %v773 = vpack.c.b16 %v765, %v764
    %782 = vmatprep.subr.bf16.mxu0 0
    %783 = vmatpush1.bf16.msra.mxu0 %v766
    %784 = vmatprep.subr.bf16.mxu0 0
    %785 = vmatpush1.bf16.msra.mxu0 %v767
    %786 = vmatprep.subr.bf16.mxu0 0
    %787 = vmatpush1.bf16.msra.mxu0 %v768
    %788 = vmatprep.subr.bf16.mxu0 0
    %789 = vmatpush1.bf16.msra.mxu0 %v769
    %790 = vmatprep.subr.bf16.mxu0 0
    %791 = vmatpush1.bf16.msra.mxu0 %v770
    %792 = vmatprep.subr.bf16.mxu0 0
    %793 = vmatpush1.bf16.msra.mxu0 %v771
    %794 = vmatprep.subr.bf16.mxu0 0
    %795 = vmatpush1.bf16.msra.mxu0 %v772
    %796 = vmatprep.subr.bf16.mxu0 0
    %797 = vmatpush1.bf16.msra.mxu0 %v773
    %798 = vmatprep.subr.bf16.mxu0 0
    %799 = vmatpush1.bf16.msra.mxu0 0
    %800 = vmatprep.subr.bf16.mxu0 0
    %801 = vmatpush1.bf16.msra.mxu0 0
    %802 = vmatprep.subr.bf16.mxu0 0
    %803 = vmatpush1.bf16.msra.mxu0 0
    %804 = vmatprep.subr.bf16.mxu0 0
    %805 = vmatpush1.bf16.msra.mxu0 0
    %806 = vmatprep.subr.bf16.mxu0 0
    %807 = vmatpush1.bf16.msra.mxu0 0
    %808 = vmatprep.subr.bf16.mxu0 0
    %809 = vmatpush1.bf16.msra.mxu0 0
    %810 = vmatprep.subr.bf16.mxu0 0
    %811 = vmatpush1.bf16.msra.mxu0 0
    %812 = vmatprep.subr.bf16.mxu0 0
    %813 = vmatpush1.bf16.msra.mxu0 0
    %814 = vmatprep.mubr.bf16.mxu0 0
    %815 = vmatmul.mubr.bf16.gmra.mrb[0].mxu0 %v710
    %v816 = vpop.f32.mrb[0].mxu0
    %v817 = vadd.f32 %v732, %v816
    %v818 = vpop.f32.mrb[0].mxu0
    %v819 = vpop.f32.mrb[0].mxu0
    %v820 = vpop.f32.mrb[0].mxu0
    %821 = vdwg.mxu0
    %v822 = vmax.f32 %v817, 0.0
    %v823 = vpack.c.bf16 %v822, %v822
    %v824 = vld [vmem:[#allocation15] sm:$0xf]
    %v825 = vld [vmem:[#allocation15 + $0x4] sm:$0xf]
    %v826 = vld [vmem:[#allocation15 + $0x8] sm:$0xf]
    %v827 = vld [vmem:[#allocation15 + $0xc] sm:$0xf]
    %v828 = vld [vmem:[#allocation15 + $0x10] sm:$0xf]
    %v829 = vld [vmem:[#allocation15 + $0x14] sm:$0xf]
    %v830 = vld [vmem:[#allocation15 + $0x18] sm:$0xf]
    %v831 = vld [vmem:[#allocation15 + $0x1c] sm:$0xf]
    %v832 = vld [vmem:[#allocation15 + $0x20] sm:$0xf]
    %v833 = vld [vmem:[#allocation15 + $0x24] sm:$0xf]
    %v834 = vld [vmem:[#allocation15 + $0x28] sm:$0xf]
    %v835 = vld [vmem:[#allocation15 + $0x2c] sm:$0xf]
    %v836 = vld [vmem:[#allocation15 + $0x30] sm:$0xf]
    %v837 = vld [vmem:[#allocation15 + $0x34] sm:$0xf]
    %v838 = vld [vmem:[#allocation15 + $0x38] sm:$0xf]
    %v839 = vld [vmem:[#allocation15 + $0x3c] sm:$0xf]
    %v856 = vunpack.c.l.b16 %v824
    %v857 = vunpack.c.l.b16 %v825
    %v858 = vunpack.c.l.b16 %v826
    %v859 = vunpack.c.l.b16 %v827
    %v860 = vunpack.c.l.b16 %v828
    %v861 = vunpack.c.l.b16 %v829
    %v862 = vunpack.c.l.b16 %v830
    %v863 = vunpack.c.l.b16 %v831
    %v864 = vunpack.c.l.b16 %v832
    %v865 = vunpack.c.l.b16 %v833
    %v866 = vunpack.c.l.b16 %v834
    %v867 = vunpack.c.l.b16 %v835
    %v868 = vunpack.c.l.b16 %v836
    %v869 = vunpack.c.l.b16 %v837
    %v870 = vunpack.c.l.b16 %v838
    %v871 = vunpack.c.l.b16 %v839
    %v872 = vpack.c.b16 %v857, %v856
    %v873 = vpack.c.b16 %v859, %v858
    %v874 = vpack.c.b16 %v861, %v860
    %v875 = vpack.c.b16 %v863, %v862
    %v876 = vpack.c.b16 %v865, %v864
    %v877 = vpack.c.b16 %v867, %v866
    %v878 = vpack.c.b16 %v869, %v868
    %v879 = vpack.c.b16 %v871, %v870
    %888 = vmatprep.subr.bf16.mxu0 0
    %889 = vmatpush1.bf16.msra.mxu0 %v872
    %890 = vmatprep.subr.bf16.mxu0 0
    %891 = vmatpush1.bf16.msra.mxu0 %v873
    %892 = vmatprep.subr.bf16.mxu0 0
    %893 = vmatpush1.bf16.msra.mxu0 %v874
    %894 = vmatprep.subr.bf16.mxu0 0
    %895 = vmatpush1.bf16.msra.mxu0 %v875
    %896 = vmatprep.subr.bf16.mxu0 0
    %897 = vmatpush1.bf16.msra.mxu0 %v876
    %898 = vmatprep.subr.bf16.mxu0 0
    %899 = vmatpush1.bf16.msra.mxu0 %v877
    %900 = vmatprep.subr.bf16.mxu0 0
    %901 = vmatpush1.bf16.msra.mxu0 %v878
    %902 = vmatprep.subr.bf16.mxu0 0
    %903 = vmatpush1.bf16.msra.mxu0 %v879
    %904 = vmatprep.subr.bf16.mxu0 0
    %905 = vmatpush1.bf16.msra.mxu0 0
    %906 = vmatprep.subr.bf16.mxu0 0
    %907 = vmatpush1.bf16.msra.mxu0 0
    %908 = vmatprep.subr.bf16.mxu0 0
    %909 = vmatpush1.bf16.msra.mxu0 0
    %910 = vmatprep.subr.bf16.mxu0 0
    %911 = vmatpush1.bf16.msra.mxu0 0
    %912 = vmatprep.subr.bf16.mxu0 0
    %913 = vmatpush1.bf16.msra.mxu0 0
    %914 = vmatprep.subr.bf16.mxu0 0
    %915 = vmatpush1.bf16.msra.mxu0 0
    %916 = vmatprep.subr.bf16.mxu0 0
    %917 = vmatpush1.bf16.msra.mxu0 0
    %918 = vmatprep.subr.bf16.mxu0 0
    %919 = vmatpush1.bf16.msra.mxu0 0
    %920 = vmatprep.mubr.bf16.mxu0 0
    %921 = vmatmul.mubr.bf16.gmra.mrb[0].mxu0 %v823
    %v922 = vpop.f32.mrb[0].mxu0
    %v923 = vadd.f32 0.0, %v922
    %v924 = vpop.f32.mrb[0].mxu0
    %v925 = vpop.f32.mrb[0].mxu0
    %v926 = vpop.f32.mrb[0].mxu0
    %927 = vdwg.mxu0
    %v928 = vadd.f32 %v596, %v923
    %v929 = vld [vmem:[#allocation16] sm:$0x1]
    %v931 = vlaneseq
    %v932 = vshrl.u32 %v931, 7
    %v933 = vsub.s32 0, %v932
    %v934 = vrot.slane %v929, %v933
    %v936 = vadd.f32 %v928, %v934
    %937 = vst [vmem:[%s17] sm:$0xff] %v936
    // Predicated region
    $region110: #{amio_forward.1} parent=1 // pred_check
      _
    $region111: #{amio_forward.1} parent=1 // pred_check_branch
      %939 = sbr.rel (0) target = $region113
    $region112: #{amio_forward.1} parent=1 // pred_region
      _
    $region113: #{amio_forward.1} parent=1 // pred_fallthru
      _
    // Predicated region
    $region114: #{amio_forward.1} parent=1 // pred_check
      _
    $region115: #{amio_forward.1} parent=1 // pred_check_branch
      %941 = sbr.rel (0) target = $region117
    $region116: #{amio_forward.1} parent=1 // pred_region
      _
    $region117: #{amio_forward.1} parent=1 // pred_fallthru
      _
    %942 = vsyncpa [#allocation3], 1
    %943 = vsyncpa [#allocation5], 1
    %944 = vsyncpa [#allocation8], 1
    %945 = vsyncpa [#allocation11], 1
    %946 = vsyncpa [#allocation14], 1
    %947 = vsyncpa [#allocation17], 1

</llo_original>
